<compile_context>
chip_gen: v7x
topology: tpu7x:2x2x1
jax: 0.10.0
libtpu: 0.0.40
codegen_flags: <defaults>
</compile_context>

<pallas_src>
import functools
import math

import jax
import jax.numpy as jnp
from jax.experimental import pallas as pl
from jax.experimental.pallas import tpu as pltpu


def _round_up(x, m):
    return ((x + m - 1) // m) * m


def _cdiv(a, b):
    return (a + b - 1) // b


def _vmem_capacity_bytes():
    """Physical VMEM per TensorCore; conservative fallback if unknown."""
    try:
        info = pltpu.get_tpu_info()
        cap = int(getattr(info, "vmem_capacity_bytes", 0) or 0)
        if cap > 0:
            return cap
    except Exception:
        pass
    return 64 << 20  # v7x-sized fallback (smallest supported generation)


def _pack_params(weights, biases):
    """Pack all (out_i, in_i) weights + biases into one lane-aligned f32 slab.

    Layer i occupies rows [0:out_i] of a 128-aligned column band:
      cols [off_i : off_i + in_i] -> W_i (PyTorch (out, in) orientation)
      col  [off_i + in_i]         -> b_i
    Returns (packed_f32, col_offsets).
    """
    rows = _round_up(max(w.shape[0] for w in weights), 8)
    col_offsets, col = [], 0
    for w in weights:
        col_offsets.append(col)
        col += _round_up(w.shape[1] + 1, 128)
    packed = jnp.zeros((rows, col), jnp.float32)
    for i, (w, b) in enumerate(zip(weights, biases)):
        out_i, in_i = w.shape
        off = col_offsets[i]
        packed = packed.at[:out_i, off:off + in_i].set(w.astype(jnp.float32))
        packed = packed.at[:out_i, off + in_i].set(
            jnp.reshape(b, (-1,)).astype(jnp.float32))
    return packed, tuple(col_offsets)


def _mlp_kernel(layer_dims, col_offsets, activation, compute_dtype,
                x_ref, p_ref, o_ref):
    """Fused MLP on a lane-dense (features, block_batch) activation slab.

    x_ref : (in_dim, block_batch)
    p_ref : packed weights/biases, resident in VMEM (constant index map)
    o_ref : (out_dim, block_batch)
    """
    depth = len(layer_dims) - 1
    act = jnp.tanh if activation == "tanh" else jnp.sin
    cdt = compute_dtype

    h = x_ref[...].astype(cdt)                                   # (in_dim, B)
    for i in range(depth):
        in_i, out_i = layer_dims[i], layer_dims[i + 1]
        off = col_offsets[i]
        w = p_ref[0:out_i, off:off + in_i].astype(cdt)           # (out_i, in_i)
        b = p_ref[0:out_i, off + in_i:off + in_i + 1]            # (out_i, 1) f32
        # bf16 (or f32) MXU operands, f32 accumulation, f32 bias add.
        pre = jnp.dot(w, h, preferred_element_type=jnp.float32) + b
        if i != depth - 1:
            h = act(pre.astype(cdt))        # activation in compute dtype
        else:
            h = pre
    o_ref[...] = h.astype(o_ref.dtype)


def solution_mlp_forward_lane_major(t_lm, weights, biases, *, activation="tanh",
                                    compute_dtype=jnp.bfloat16, block_batch=None):
    """Lane-major entry point: t_lm is (in_dim, batch) -> (out_dim, batch).

    Use this when activations are kept persistently in (features, batch) layout
    across repeated calls — it avoids the wrapper transpose copies entirely.
    """
    depth = len(weights)
    in_dim, batch = t_lm.shape
    out_dim = weights[-1].shape[0]
    layer_dims = tuple([in_dim] + [w.shape[0] for w in weights])
    max_width = max(layer_dims)
    itemsize = 4

    packed, col_offsets = _pack_params(weights, biases)
    param_bytes = int(packed.size) * itemsize

    # ---- generation-aware VMEM budget (~72% of physical) ----
    phys_vmem = _vmem_capacity_bytes()
    vmem_budget = int(phys_vmem * 0.72)
    # per-lane f32 bytes: double-buffered I/O tiles + ~5 live (max_width,) temps
    per_lane = (2 * (in_dim + out_dim) + 5 * max_width) * itemsize
    cap_lanes = max(128, (vmem_budget - 2 * param_bytes) // per_lane)
    cap_lanes = min(cap_lanes, 32768 if phys_vmem <= (96 << 20) else 65536)
    cap_lanes = (cap_lanes // 128) * 128

    # ---- tile sizing: batch on the lane axis, big tiles, >=4 grid steps ----
    lane_batch = _round_up(batch, 128)
    if block_batch is None:
        blk = max(8192, _round_up(max(lane_batch // 8, 1), 128))
        blk = min(blk, cap_lanes, lane_batch)
        # v7x megacore: 2 TCs x double buffering -> >=4 steps when batch allows.
        if _cdiv(lane_batch, blk) < 4 and lane_batch >= 4 * 128:
            blk = max(128, ((lane_batch // 4) // 128) * 128)
    else:
        blk = _round_up(max(block_batch, 128), 128)
        blk = min(blk, cap_lanes, lane_batch)
    grid = (_cdiv(lane_batch, blk),)   # last block may be ragged (masked writes)

    if lane_batch != batch:
        t_lm = jnp.pad(t_lm, ((0, 0), (0, lane_batch - batch)))

    in_specs = [
        pl.BlockSpec((in_dim, blk), lambda i: (0, i)),
        # Constant index map: packed weights/biases stay resident in VMEM.
        pl.BlockSpec(packed.shape, lambda i: (0, 0)),
    ]
    out_spec = pl.BlockSpec((out_dim, blk), lambda i: (0, i))

    macs = sum(layer_dims[i] * layer_dims[i + 1] for i in range(depth))
    cost = pl.CostEstimate(
        flops=2 * lane_batch * macs,
        transcendentals=lane_batch * sum(layer_dims[1:-1]),
        bytes_accessed=lane_batch * (in_dim + out_dim) * itemsize + param_bytes,
    )

    out_lm = pl.pallas_call(
        functools.partial(_mlp_kernel, layer_dims, col_offsets, activation,
                          compute_dtype),
        out_shape=jax.ShapeDtypeStruct((out_dim, lane_batch), t_lm.dtype),
        grid_spec=pltpu.PrefetchScalarGridSpec(
            num_scalar_prefetch=0,
            grid=grid,
            in_specs=in_specs,
            out_specs=out_spec,
        ),
        compiler_params=pltpu.CompilerParams(
            dimension_semantics=("parallel",),
            vmem_limit_bytes=vmem_budget,
        ),
        cost_estimate=cost,
    )(t_lm, packed)

    return out_lm[:, :batch] if lane_batch != batch else out_lm


def solution_mlp_forward(t, weights, biases, *, activation="tanh",
                         compute_dtype=jnp.bfloat16, block_batch=None,
                         mapping=None):
    """PyTorch-convention wrapper: t is (batch, in_dim) -> (batch, out_dim)."""
    if mapping is not None:
        # TODO(synk): `mapping` is an arbitrary Python callable in the PyTorch
        # module; it is applied here as plain JAX outside the kernel.
        t = mapping(t)
    out_lm = solution_mlp_forward_lane_major(
        t.T, weights, biases, activation=activation,
        compute_dtype=compute_dtype, block_batch=block_batch)
    return out_lm.T


def init_params(layers, key):
    """Deterministic init mimicking nn.Linear default (uniform +/- 1/sqrt(fan_in)).

    Weights stored in PyTorch (out, in) orientation; biases as (out, 1).
    """
    weights, biases = [], []
    for i in range(len(layers) - 1):
        fan_in, fan_out = layers[i], layers[i + 1]
        bound = 1.0 / math.sqrt(fan_in)
        key, kw, kb = jax.random.split(key, 3)
        w = jax.random.uniform(kw, (fan_out, fan_in), jnp.float32, -bound, bound)
        b = jax.random.uniform(kb, (fan_out, 1), jnp.float32, -bound, bound)
        weights.append(w)
        biases.append(b)
    return weights, biases


def reference_mlp(t, weights, biases, activation="tanh"):
    act = jnp.tanh if activation == "tanh" else jnp.sin
    h = t
    n = len(weights)
    for i, (w, b) in enumerate(zip(weights, biases)):
        h = h @ w.T + b.reshape(1, -1)
        if i != n - 1:
            h = act(h)
    return h


if __name__ == "__main__":
    # SolutionMLP(layers="4,32,32,3", activation="tanh", mapping=None)
    # Small batches here are for correctness only; perf target is large batch.
    layers = [4, 32, 32, 3]

    key = jax.random.PRNGKey(0)
    key, k_params = jax.random.split(key)
    weights, biases = init_params(layers, k_params)

    ok = True
    # 16: pad-to-128, single block.  1100: pad-to-128 + ragged last grid block.
    for batch in (16, 1100):
        key, k_in = jax.random.split(key)
        t = jax.random.normal(k_in, (batch, layers[0]), jnp.float32)
        ref = reference_mlp(t, weights, biases, activation="tanh")

        # f32 MXU path: tight check against the f32 reference.
        out32 = solution_mlp_forward(t, weights, biases, activation="tanh",
                                     compute_dtype=jnp.float32)
        out32 = jax.block_until_ready(out32)
        ok &= out32.shape == (batch, layers[-1])
        ok &= bool(jnp.allclose(out32, ref, atol=1e-5, rtol=1e-5))

        # Default bf16-operand path: loose tolerance (bf16 mantissa).
        out16 = solution_mlp_forward(t, weights, biases, activation="tanh")
        out16 = jax.block_until_ready(out16)
        ok &= out16.shape == (batch, layers[-1])
        ok &= bool(jnp.allclose(out16, ref, atol=5e-2, rtol=5e-2))

    assert ok, "mismatch vs reference"
    print("KERNEL_OK")
</pallas_src>

<mosaic_0001>
module attributes {stable_mosaic.version = 11 : i64} {
  func.func @_mlp_kernel(%arg0: i32, %arg1: memref<4x128xf32, #tpu.memory_space<vmem>>, %arg2: memref<32x384xf32, #tpu.memory_space<vmem>>, %arg3: memref<3x128xf32, #tpu.memory_space<vmem>>) attributes {dimension_semantics = [#tpu.dimension_semantics<parallel>], iteration_bounds = array<i64: 1>, scalar_prefetch = 0 : i64, scratch_operands = 0 : i64, tpu.core_type = #tpu.core_type<tc>, window_params = [{transform_indices = @transform_0, window_bounds = array<i64: 4, 128>}, {pipeline_mode = #tpu.pipeline_mode<synchronous>, transform_indices = @transform_1, window_bounds = array<i64: 32, 384>}, {transform_indices = @transform_2, window_bounds = array<i64: 3, 128>}]} {
    %c0 = arith.constant 0 : index
    %c0_0 = arith.constant 0 : index
    %0 = vector.load %arg1[%c0, %c0_0] : memref<4x128xf32, #tpu.memory_space<vmem>>, vector<4x128xf32>
    %c0_1 = arith.constant 0 : index
    %c0_2 = arith.constant 0 : index
    %1 = vector.load %arg2[%c0_1, %c0_2] : memref<32x384xf32, #tpu.memory_space<vmem>>, vector<32x4xf32>
    %c0_3 = arith.constant 0 : index
    %c4 = arith.constant 4 : index
    %2 = vector.load %arg2[%c0_3, %c4] : memref<32x384xf32, #tpu.memory_space<vmem>>, vector<32x1xf32>
    %cst = arith.constant dense<0.000000e+00> : vector<32x128xf32>
    %3 = tpu.matmul %1, %0, %cst {dimension_numbers = #tpu.dot_dimension_numbers<[1], [0], [0], [1], [0, 0, 1, 1], [], []>} : vector<32x4xf32>, vector<4x128xf32>, vector<32x128xf32> -> vector<32x128xf32>
    %4 = vector.broadcast %2 : vector<32x1xf32> to vector<32x128xf32>
    %5 = arith.addf %3, %4 : vector<32x128xf32>
    %6 = math.tanh %5 : vector<32x128xf32>
    %c0_4 = arith.constant 0 : index
    %c128 = arith.constant 128 : index
    %7 = vector.load %arg2[%c0_4, %c128] : memref<32x384xf32, #tpu.memory_space<vmem>>, vector<32x32xf32>
    %c0_5 = arith.constant 0 : index
    %c160 = arith.constant 160 : index
    %8 = vector.load %arg2[%c0_5, %c160] : memref<32x384xf32, #tpu.memory_space<vmem>>, vector<32x1xf32>
    %cst_6 = arith.constant dense<0.000000e+00> : vector<32x128xf32>
    %9 = tpu.matmul %7, %6, %cst_6 {dimension_numbers = #tpu.dot_dimension_numbers<[1], [0], [0], [1], [0, 0, 1, 1], [], []>} : vector<32x32xf32>, vector<32x128xf32>, vector<32x128xf32> -> vector<32x128xf32>
    %10 = vector.broadcast %8 : vector<32x1xf32> to vector<32x128xf32>
    %11 = arith.addf %9, %10 : vector<32x128xf32>
    %12 = math.tanh %11 : vector<32x128xf32>
    %c0_7 = arith.constant 0 : index
    %c256 = arith.constant 256 : index
    %13 = vector.load %arg2[%c0_7, %c256] : memref<32x384xf32, #tpu.memory_space<vmem>>, vector<3x32xf32>
    %c0_8 = arith.constant 0 : index
    %c288 = arith.constant 288 : index
    %14 = vector.load %arg2[%c0_8, %c288] : memref<32x384xf32, #tpu.memory_space<vmem>>, vector<3x1xf32>
    %cst_9 = arith.constant dense<0.000000e+00> : vector<3x128xf32>
    %15 = tpu.matmul %13, %12, %cst_9 {dimension_numbers = #tpu.dot_dimension_numbers<[1], [0], [0], [1], [0, 0, 1, 1], [], []>} : vector<3x32xf32>, vector<32x128xf32>, vector<3x128xf32> -> vector<3x128xf32>
    %16 = vector.broadcast %14 : vector<3x1xf32> to vector<3x128xf32>
    %17 = arith.addf %15, %16 : vector<3x128xf32>
    %c0_10 = arith.constant 0 : index
    %c0_11 = arith.constant 0 : index
    %18 = vector.load %arg3[%c0_10, %c0_11] : memref<3x128xf32, #tpu.memory_space<vmem>>, vector<3x128xf32>
    tpu.vector_store %arg3[%c0_10, %c0_11], %17 {strides = array<i32>} : memref<3x128xf32, #tpu.memory_space<vmem>>, vector<3x128xf32>,
    return
  }
  func.func @transform_0(%arg0: i32) -> (i32, i32) {
    %c0_i32 = arith.constant 0 : i32
    %c0_i32_0 = arith.constant 0 : i32
    return %c0_i32, %arg0 : i32, i32
  }
  func.func @transform_1(%arg0: i32) -> (i32, i32) {
    %c0_i32 = arith.constant 0 : i32
    %c0_i32_0 = arith.constant 0 : i32
    %c0_i32_1 = arith.constant 0 : i32
    return %c0_i32, %c0_i32_0 : i32, i32
  }
  func.func @transform_2(%arg0: i32) -> (i32, i32) {
    %c0_i32 = arith.constant 0 : i32
    %c0_i32_0 = arith.constant 0 : i32
    return %c0_i32, %arg0 : i32, i32
  }
}

</mosaic_0001>

<llo_original>
// kernel: tpu_custom_call.1
$region0: #{tpu_custom_call.1}
  #allocation0 [shape = 'u32[]', space=smem, size = 0x4, offset = 0x4, fixed_abs, tag = 'smem constant byte address 0x4 - core index']
  #allocation1 [shape = 'u32[144,128]{1,0:T(1,128)}', space=vmem, size = 0x12000, scoped, tag = 'internal scratch']
  %s0 = inlined_call_operand.hbm [shape: f32[4,128], index: 0, kind: input, shape index: {}]
  %s1 = inlined_call_operand.hbm [shape: f32[32,384], index: 1, kind: input, shape index: {}]
  %s2 = inlined_call_operand.hbm [shape: f32[3,128], index: 2, kind: output, shape index: {}]
  %s3 = sld [smem:[#allocation0]]
  $region26: #{tpu_custom_call.1} parent=0
    _
  %s5 = ssub.s32 1, %s3
  %s6 = scalar_select 0, %s5, %s3
  $region1: #{tpu_custom_call.1} parent=0
    #allocation2 [shape = 'u8[2048]{0}', space=vmem, size = 0x800, scoped, tag = 'input window, operand 0, single buffered']
    #allocation3 [shape = 's32[1]{0}', space=sflag, size = 0x4, scoped, tag = 'scoped memory for tpu_custom_call.1']
    #allocation4 [shape = 's32[1]{0}', space=sflag, size = 0x4, scoped, tag = 'scoped memory for tpu_custom_call.1']
    #allocation5 [shape = 'u8[49152]{0}', space=vmem, size = 0xc000, scoped, tag = 'input window, operand 1, single buffered']
    #allocation6 [shape = 's32[1]{0}', space=sflag, size = 0x4, scoped, tag = 'scoped memory for tpu_custom_call.1']
    #allocation7 [shape = 'u8[2048]{0}', space=vmem, size = 0x800, scoped, tag = 'output window, operand 0, single buffered']
    %7 = vsyncpa [#allocation3], 0
    %8 = vsyncpa [#allocation6], 0
    %9 = vsyncpa [#allocation4], 0
    // Predicated region
    $region2: #{tpu_custom_call.1} parent=1 // pred_check
      _
    $region3: #{tpu_custom_call.1} parent=1 // pred_check_branch
      %11 = sbr.rel (0) target = $region5
    $region4: #{tpu_custom_call.1} parent=1 // pred_region
      %s13 = ssub.s32 64, 64
      %14 = vsyncadd [#allocation3], %s13
      %s16 = sshll.u32 [#allocation2], 4
      %s17 = int_to_ptr.vmem [resolvable:$true] %s16
      %19 = dma.hbm_to_vmem [thread:$0]  %s0, 64, %s17, [#allocation3]
    $region5: #{tpu_custom_call.1} parent=1 // pred_fallthru
      _
    // Predicated region
    $region6: #{tpu_custom_call.1} parent=1 // pred_check
      _
    $region7: #{tpu_custom_call.1} parent=1 // pred_check_branch
      %21 = sbr.rel (0) target = $region9
    $region8: #{tpu_custom_call.1} parent=1 // pred_region
      %s23 = ssub.s32 1536, 1536
      %24 = vsyncadd [#allocation6], %s23
      %s25 = sshll.u32 [#allocation5], 4
      %s26 = int_to_ptr.vmem [resolvable:$true] %s25
      %31 = dma.hbm_to_vmem [thread:$0]  %s1, 1536, %s26, [#allocation6], 384, 384, 24
    $region9: #{tpu_custom_call.1} parent=1 // pred_fallthru
      _
    // Predicated region
    $region10: #{tpu_custom_call.1} parent=1 // pred_check
      _
    $region11: #{tpu_custom_call.1} parent=1 // pred_check_branch
      %33 = sbr.rel (0) target = $region13
    $region12: #{tpu_custom_call.1} parent=1 // pred_region
      %34 = dma.done [#allocation3], 64
    $region13: #{tpu_custom_call.1} parent=1 // pred_fallthru
      _
    // Predicated region
    $region14: #{tpu_custom_call.1} parent=1 // pred_check
      _
    $region15: #{tpu_custom_call.1} parent=1 // pred_check_branch
      %36 = sbr.rel (0) target = $region17
    $region16: #{tpu_custom_call.1} parent=1 // pred_region
      %37 = dma.done [#allocation6], 1536
    $region17: #{tpu_custom_call.1} parent=1 // pred_fallthru
      _
    %v38 = vld [vmem:[#allocation2] sm:$0xf]
    %v39 = vld [vmem:[#allocation5] sm:$0xff]
    %v40 = vld [vmem:[#allocation5 + $0x18] sm:$0xff]
    %v41 = vld [vmem:[#allocation5 + $0x30] sm:$0xff]
    %v42 = vld [vmem:[#allocation5 + $0x48] sm:$0xff]
    %44 = vset.pattern.permute.xlu0 4
    %45 = vperm.xlu0 %44, %v39
    %v46 = vpop.permute.xlu0 %45
    %49 = vset.pattern.permute.xlu0 4
    %50 = vperm.xlu0 %49, %v40
    %v51 = vpop.permute.xlu0 %50
    %54 = vset.pattern.permute.xlu0 4
    %55 = vperm.xlu0 %54, %v41
    %v56 = vpop.permute.xlu0 %55
    %59 = vset.pattern.permute.xlu0 4
    %60 = vperm.xlu0 %59, %v42
    %v61 = vpop.permute.xlu0 %60
    %vm63 = vcmask 31744
    %v64 = vsel %vm63, %v39, 0
    %v66 = vsel %vm63, %v40, 0
    %v68 = vsel %vm63, %v41, 0
    %v70 = vsel %vm63, %v42, 0
    %vm72 = vcmask 1043456
    %v74 = vsel %vm72, %v38, 0
    %76 = vmatprep.subr.mxu0 0.0
    %77 = vmatpush1.msra.mxu0 %v74
    %78 = vmatprep.subr.mxu0 0.0
    %79 = vmatpush1.msra.mxu0 0.0
    %80 = vmatprep.subr.mxu0 0.0
    %81 = vmatpush1.msra.mxu0 0.0
    %82 = vmatprep.subr.mxu0 0.0
    %83 = vmatpush1.msra.mxu0 0.0
    %84 = vmatprep.subr.mxu0 0.0
    %85 = vmatpush1.msra.mxu0 0.0
    %86 = vmatprep.subr.mxu0 0.0
    %87 = vmatpush1.msra.mxu0 0.0
    %88 = vmatprep.subr.mxu0 0.0
    %89 = vmatpush1.msra.mxu0 0.0
    %90 = vmatprep.subr.mxu0 0.0
    %91 = vmatpush1.msra.mxu0 0.0
    %92 = vmatprep.subr.mxu0 0.0
    %93 = vmatpush1.msra.mxu0 0.0
    %94 = vmatprep.subr.mxu0 0.0
    %95 = vmatpush1.msra.mxu0 0.0
    %96 = vmatprep.subr.mxu0 0.0
    %97 = vmatpush1.msra.mxu0 0.0
    %98 = vmatprep.subr.mxu0 0.0
    %99 = vmatpush1.msra.mxu0 0.0
    %100 = vmatprep.subr.mxu0 0.0
    %101 = vmatpush1.msra.mxu0 0.0
    %102 = vmatprep.subr.mxu0 0.0
    %103 = vmatpush1.msra.mxu0 0.0
    %104 = vmatprep.subr.mxu0 0.0
    %105 = vmatpush1.msra.mxu0 0.0
    %106 = vmatprep.subr.mxu0 0.0
    %107 = vmatpush1.msra.mxu0 0.0
    %108 = vmatprep.subr.mxu0 0.0
    %109 = vmatpush1.msra.mxu0 0.0
    %110 = vmatprep.subr.mxu0 0.0
    %111 = vmatpush1.msra.mxu0 0.0
    %112 = vmatprep.subr.mxu0 0.0
    %113 = vmatpush1.msra.mxu0 0.0
    %114 = vmatprep.subr.mxu0 0.0
    %115 = vmatpush1.msra.mxu0 0.0
    %116 = vmatprep.subr.mxu0 0.0
    %117 = vmatpush1.msra.mxu0 0.0
    %118 = vmatprep.subr.mxu0 0.0
    %119 = vmatpush1.msra.mxu0 0.0
    %120 = vmatprep.subr.mxu0 0.0
    %121 = vmatpush1.msra.mxu0 0.0
    %122 = vmatprep.subr.mxu0 0.0
    %123 = vmatpush1.msra.mxu0 0.0
    %124 = vmatprep.subr.mxu0 0.0
    %125 = vmatpush1.msra.mxu0 0.0
    %126 = vmatprep.subr.mxu0 0.0
    %127 = vmatpush1.msra.mxu0 0.0
    %128 = vmatprep.subr.mxu0 0.0
    %129 = vmatpush1.msra.mxu0 0.0
    %130 = vmatprep.subr.mxu0 0.0
    %131 = vmatpush1.msra.mxu0 0.0
    %132 = vmatprep.subr.mxu0 0.0
    %133 = vmatpush1.msra.mxu0 0.0
    %134 = vmatprep.subr.mxu0 0.0
    %135 = vmatpush1.msra.mxu0 0.0
    %136 = vmatprep.subr.mxu0 0.0
    %137 = vmatpush1.msra.mxu0 0.0
    %138 = vmatprep.subr.mxu0 0.0
    %139 = vmatpush1.msra.mxu0 0.0
    %140 = vmatprep.mubr.f32.mxu0 0.0
    %141 = vmatmul.mubr.f32.gmra.mrb[0].mxu0 %v64
    %v142 = vpop.f32.mrb[0].mxu0
    %v143 = vadd.f32 %v46, %v142
    %v144 = vpop.f32.mrb[0].mxu0
    %145 = vmatprep.mubr.f32.mxu0 0.0
    %146 = vmatmul.mubr.f32.gmra.mrb[0].mxu0 %v66
    %v147 = vpop.f32.mrb[0].mxu0
    %v148 = vadd.f32 %v51, %v147
    %v149 = vpop.f32.mrb[0].mxu0
    %150 = vmatprep.mubr.f32.mxu0 0.0
    %151 = vmatmul.mubr.f32.gmra.mrb[0].mxu0 %v68
    %v152 = vpop.f32.mrb[0].mxu0
    %v153 = vadd.f32 %v56, %v152
    %v154 = vpop.f32.mrb[0].mxu0
    %155 = vmatprep.mubr.f32.mxu0 0.0
    %156 = vmatmul.mubr.f32.gmra.mrb[0].mxu0 %v70
    %v157 = vpop.f32.mrb[0].mxu0
    %v158 = vadd.f32 %v61, %v157
    %v159 = vpop.f32.mrb[0].mxu0
    %160 = vdwg.mxu0
    %v161 = vtanh.pop %v143
    %v162 = vtanh.pop %v148
    %v163 = vtanh.pop %v153
    %v164 = vtanh.pop %v158
    %v165 = vld [vmem:[#allocation5 + $0x8] sm:$0xff]
    %v166 = vld [vmem:[#allocation5 + $0x20] sm:$0xff]
    %v167 = vld [vmem:[#allocation5 + $0x38] sm:$0xff]
    %v168 = vld [vmem:[#allocation5 + $0x50] sm:$0xff]
    %170 = vset.pattern.permute.xlu0 32
    %171 = vperm.xlu0 %170, %v165
    %v172 = vpop.permute.xlu0 %171
    %175 = vset.pattern.permute.xlu0 32
    %176 = vperm.xlu0 %175, %v166
    %v177 = vpop.permute.xlu0 %176
    %180 = vset.pattern.permute.xlu0 32
    %181 = vperm.xlu0 %180, %v167
    %v182 = vpop.permute.xlu0 %181
    %185 = vset.pattern.permute.xlu0 32
    %186 = vperm.xlu0 %185, %v168
    %v187 = vpop.permute.xlu0 %186
    %vm189 = vcmask 261120
    %v190 = vsel %vm189, %v165, 0
    %v192 = vsel %vm189, %v166, 0
    %v194 = vsel %vm189, %v167, 0
    %v196 = vsel %vm189, %v168, 0
    %198 = vmatprep.subr.mxu0 0.0
    %199 = vmatpush1.msra.mxu0 %v161
    %200 = vmatprep.subr.mxu0 0.0
    %201 = vmatpush1.msra.mxu0 %v162
    %202 = vmatprep.subr.mxu0 0.0
    %203 = vmatpush1.msra.mxu0 %v163
    %204 = vmatprep.subr.mxu0 0.0
    %205 = vmatpush1.msra.mxu0 %v164
    %206 = vmatprep.subr.mxu0 0.0
    %207 = vmatpush1.msra.mxu0 0.0
    %208 = vmatprep.subr.mxu0 0.0
    %209 = vmatpush1.msra.mxu0 0.0
    %210 = vmatprep.subr.mxu0 0.0
    %211 = vmatpush1.msra.mxu0 0.0
    %212 = vmatprep.subr.mxu0 0.0
    %213 = vmatpush1.msra.mxu0 0.0
    %214 = vmatprep.subr.mxu0 0.0
    %215 = vmatpush1.msra.mxu0 0.0
    %216 = vmatprep.subr.mxu0 0.0
    %217 = vmatpush1.msra.mxu0 0.0
    %218 = vmatprep.subr.mxu0 0.0
    %219 = vmatpush1.msra.mxu0 0.0
    %220 = vmatprep.subr.mxu0 0.0
    %221 = vmatpush1.msra.mxu0 0.0
    %222 = vmatprep.subr.mxu0 0.0
    %223 = vmatpush1.msra.mxu0 0.0
    %224 = vmatprep.subr.mxu0 0.0
    %225 = vmatpush1.msra.mxu0 0.0
    %226 = vmatprep.subr.mxu0 0.0
    %227 = vmatpush1.msra.mxu0 0.0
    %228 = vmatprep.subr.mxu0 0.0
    %229 = vmatpush1.msra.mxu0 0.0
    %230 = vmatprep.subr.mxu0 0.0
    %231 = vmatpush1.msra.mxu0 0.0
    %232 = vmatprep.subr.mxu0 0.0
    %233 = vmatpush1.msra.mxu0 0.0
    %234 = vmatprep.subr.mxu0 0.0
    %235 = vmatpush1.msra.mxu0 0.0
    %236 = vmatprep.subr.mxu0 0.0
    %237 = vmatpush1.msra.mxu0 0.0
    %238 = vmatprep.subr.mxu0 0.0
    %239 = vmatpush1.msra.mxu0 0.0
    %240 = vmatprep.subr.mxu0 0.0
    %241 = vmatpush1.msra.mxu0 0.0
    %242 = vmatprep.subr.mxu0 0.0
    %243 = vmatpush1.msra.mxu0 0.0
    %244 = vmatprep.subr.mxu0 0.0
    %245 = vmatpush1.msra.mxu0 0.0
    %246 = vmatprep.subr.mxu0 0.0
    %247 = vmatpush1.msra.mxu0 0.0
    %248 = vmatprep.subr.mxu0 0.0
    %249 = vmatpush1.msra.mxu0 0.0
    %250 = vmatprep.subr.mxu0 0.0
    %251 = vmatpush1.msra.mxu0 0.0
    %252 = vmatprep.subr.mxu0 0.0
    %253 = vmatpush1.msra.mxu0 0.0
    %254 = vmatprep.subr.mxu0 0.0
    %255 = vmatpush1.msra.mxu0 0.0
    %256 = vmatprep.subr.mxu0 0.0
    %257 = vmatpush1.msra.mxu0 0.0
    %258 = vmatprep.subr.mxu0 0.0
    %259 = vmatpush1.msra.mxu0 0.0
    %260 = vmatprep.subr.mxu0 0.0
    %261 = vmatpush1.msra.mxu0 0.0
    %262 = vmatprep.mubr.f32.mxu0 0.0
    %263 = vmatmul.mubr.f32.gmra.mrb[0].mxu0 %v190
    %v264 = vpop.f32.mrb[0].mxu0
    %v265 = vadd.f32 %v172, %v264
    %v266 = vpop.f32.mrb[0].mxu0
    %267 = vmatprep.mubr.f32.mxu0 0.0
    %268 = vmatmul.mubr.f32.gmra.mrb[0].mxu0 %v192
    %v269 = vpop.f32.mrb[0].mxu0
    %v270 = vadd.f32 %v177, %v269
    %v271 = vpop.f32.mrb[0].mxu0
    %272 = vmatprep.mubr.f32.mxu0 0.0
    %273 = vmatmul.mubr.f32.gmra.mrb[0].mxu0 %v194
    %v274 = vpop.f32.mrb[0].mxu0
    %v275 = vadd.f32 %v182, %v274
    %v276 = vpop.f32.mrb[0].mxu0
    %277 = vmatprep.mubr.f32.mxu0 0.0
    %278 = vmatmul.mubr.f32.gmra.mrb[0].mxu0 %v196
    %v279 = vpop.f32.mrb[0].mxu0
    %v280 = vadd.f32 %v187, %v279
    %v281 = vpop.f32.mrb[0].mxu0
    %282 = vdwg.mxu0
    %v283 = vtanh.pop %v265
    %v284 = vtanh.pop %v270
    %v285 = vtanh.pop %v275
    %v286 = vtanh.pop %v280
    %v287 = vld [vmem:[#allocation5 + $0x10] sm:$0x7]
    %289 = vset.pattern.permute.xlu0 32
    %290 = vperm.xlu0 %289, %v287
    %v291 = vpop.permute.xlu0 %290
    %v293 = vsel %vm189, %v287, 0
    %295 = vmatprep.subr.mxu0 0.0
    %296 = vmatpush1.msra.mxu0 %v283
    %297 = vmatprep.subr.mxu0 0.0
    %298 = vmatpush1.msra.mxu0 %v284
    %299 = vmatprep.subr.mxu0 0.0
    %300 = vmatpush1.msra.mxu0 %v285
    %301 = vmatprep.subr.mxu0 0.0
    %302 = vmatpush1.msra.mxu0 %v286
    %303 = vmatprep.subr.mxu0 0.0
    %304 = vmatpush1.msra.mxu0 0.0
    %305 = vmatprep.subr.mxu0 0.0
    %306 = vmatpush1.msra.mxu0 0.0
    %307 = vmatprep.subr.mxu0 0.0
    %308 = vmatpush1.msra.mxu0 0.0
    %309 = vmatprep.subr.mxu0 0.0
    %310 = vmatpush1.msra.mxu0 0.0
    %311 = vmatprep.subr.mxu0 0.0
    %312 = vmatpush1.msra.mxu0 0.0
    %313 = vmatprep.subr.mxu0 0.0
    %314 = vmatpush1.msra.mxu0 0.0
    %315 = vmatprep.subr.mxu0 0.0
    %316 = vmatpush1.msra.mxu0 0.0
    %317 = vmatprep.subr.mxu0 0.0
    %318 = vmatpush1.msra.mxu0 0.0
    %319 = vmatprep.subr.mxu0 0.0
    %320 = vmatpush1.msra.mxu0 0.0
    %321 = vmatprep.subr.mxu0 0.0
    %322 = vmatpush1.msra.mxu0 0.0
    %323 = vmatprep.subr.mxu0 0.0
    %324 = vmatpush1.msra.mxu0 0.0
    %325 = vmatprep.subr.mxu0 0.0
    %326 = vmatpush1.msra.mxu0 0.0
    %327 = vmatprep.subr.mxu0 0.0
    %328 = vmatpush1.msra.mxu0 0.0
    %329 = vmatprep.subr.mxu0 0.0
    %330 = vmatpush1.msra.mxu0 0.0
    %331 = vmatprep.subr.mxu0 0.0
    %332 = vmatpush1.msra.mxu0 0.0
    %333 = vmatprep.subr.mxu0 0.0
    %334 = vmatpush1.msra.mxu0 0.0
    %335 = vmatprep.subr.mxu0 0.0
    %336 = vmatpush1.msra.mxu0 0.0
    %337 = vmatprep.subr.mxu0 0.0
    %338 = vmatpush1.msra.mxu0 0.0
    %339 = vmatprep.subr.mxu0 0.0
    %340 = vmatpush1.msra.mxu0 0.0
    %341 = vmatprep.subr.mxu0 0.0
    %342 = vmatpush1.msra.mxu0 0.0
    %343 = vmatprep.subr.mxu0 0.0
    %344 = vmatpush1.msra.mxu0 0.0
    %345 = vmatprep.subr.mxu0 0.0
    %346 = vmatpush1.msra.mxu0 0.0
    %347 = vmatprep.subr.mxu0 0.0
    %348 = vmatpush1.msra.mxu0 0.0
    %349 = vmatprep.subr.mxu0 0.0
    %350 = vmatpush1.msra.mxu0 0.0
    %351 = vmatprep.subr.mxu0 0.0
    %352 = vmatpush1.msra.mxu0 0.0
    %353 = vmatprep.subr.mxu0 0.0
    %354 = vmatpush1.msra.mxu0 0.0
    %355 = vmatprep.subr.mxu0 0.0
    %356 = vmatpush1.msra.mxu0 0.0
    %357 = vmatprep.subr.mxu0 0.0
    %358 = vmatpush1.msra.mxu0 0.0
    %359 = vmatprep.mubr.f32.mxu0 0.0
    %360 = vmatmul.mubr.f32.gmra.mrb[0].mxu0 %v293
    %v361 = vpop.f32.mrb[0].mxu0
    %v362 = vadd.f32 %v291, %v361
    %v363 = vpop.f32.mrb[0].mxu0
    %364 = vdwg.mxu0
    %365 = vst [vmem:[#allocation7] sm:$0x7] %v362
    // Predicated region
    $region18: #{tpu_custom_call.1} parent=1 // pred_check
      _
    $region19: #{tpu_custom_call.1} parent=1 // pred_check_branch
      %367 = sbr.rel (0) target = $region21
    $region20: #{tpu_custom_call.1} parent=1 // pred_region
      %s369 = ssub.s32 64, 64
      %370 = vsyncadd [#allocation4], %s369
      %s372 = sshll.u32 [#allocation7], 4
      %s373 = int_to_ptr.vmem [resolvable:$true] %s372
      %375 = dma.vmem_to_hbm [thread:$0]  %s373, 64, %s2, [#allocation4]
    $region21: #{tpu_custom_call.1} parent=1 // pred_fallthru
      _
    // Predicated region
    $region22: #{tpu_custom_call.1} parent=1 // pred_check
      _
    $region23: #{tpu_custom_call.1} parent=1 // pred_check_branch
      %377 = sbr.rel (0) target = $region25
    $region24: #{tpu_custom_call.1} parent=1 // pred_region
      %378 = dma.done [#allocation4], 64
    $region25: #{tpu_custom_call.1} parent=1 // pred_fallthru
      _
    %379 = vsyncpa [#allocation3], 1
    %380 = vsyncpa [#allocation6], 1
    %381 = vsyncpa [#allocation4], 1

</llo_original>
